<compile_context>
chip_gen: v5e
topology: v5e:2x2
jax: 0.10.0
libtpu: 0.0.40
codegen_flags: <defaults>
</compile_context>

<pallas_src>
import functools
import math

import jax
import jax.numpy as jnp
import numpy as np
from jax import lax
from jax.experimental import pallas as pl
from jax.experimental.pallas import tpu as pltpu


# ----------------------------------------------------------------------------
# pltpu.roll convention guard: returns +1 if pltpu.roll matches jnp.roll
# (output[j] = input[j - shift]), -1 if the rotation direction is flipped.
# ----------------------------------------------------------------------------
def _roll_probe_kernel(x_ref, o_ref):
    o_ref[...] = pltpu.roll(x_ref[...], 1, axis=1)


def detect_roll_sign():
    x = jnp.arange(8 * 128, dtype=jnp.float32).reshape(8, 128)
    y = pl.pallas_call(
        _roll_probe_kernel,
        out_shape=jax.ShapeDtypeStruct((8, 128), jnp.float32),
    )(x)
    return -1 if int(y[0, 0]) == 1 else 1


# ----------------------------------------------------------------------------
# Kernel
# ----------------------------------------------------------------------------
def bottleneck_lstm_cell_kernel(
    x_ref,      # (Cin,  N)      f32   N = B*H*W (batch folded onto lanes)
    h_ref,      # (Chid, N)      f32
    c_ref,      # (Chid, N)      f32
    wdx_ref,    # (9, Cin, 1)    f32   depthwise taps of self.W
    bdx_ref,    # (Cin, 1)       f32   bias of self.W
    wyx_ref,    # (Chid, Cin)    f32   self.Wy weight, x-channel block (VPU, K=4)
    wyh_ref,    # (Chid, Chid)   bf16  self.Wy weight, h-channel block (MXU)
    by_ref,     # (Chid, 1)      f32   bias of self.Wy
    wdi_ref,    # (9, Chid, 1)   f32   depthwise taps of self.Wi
    wg_ref,     # (4*Chid, Chid) bf16  fused [Wi_t; Wf_t; Wo_t; Wconv]
    h_out_ref,  # (Chid, N)      f32
    c_out_ref,  # (Chid, N)      f32
    *,
    H, W, HW, roll_sign,
):
    Cin = x_ref.shape[0]
    Chid = h_ref.shape[0]
    N = x_ref.shape[1]

    # ---- hoisted spatial-boundary masks (shared by both depthwise convs) ----
    lane = lax.broadcasted_iota(jnp.int32, (1, N), 1)
    sp = lane % HW                       # position inside one H*W image plane
    yy = sp // W
    xx = sp % W
    offs = [(dy, dx) for dy in (-1, 0, 1) for dx in (-1, 0, 1)
            if (dy, dx) != (0, 0)]
    masks = {
        (dy, dx): ((yy + dy >= 0) & (yy + dy < H) &
                   (xx + dx >= 0) & (xx + dx < W))
        for (dy, dx) in offs
    }

    def dw3x3(v, taps):
        """SAME-padded 3x3 depthwise conv on a (C, N) slab.

        Neighbour access = XLU lane roll + hoisted boundary mask.  With batch
        folded onto lanes, any roll that crosses a batch boundary only lands
        on lanes that sit on a spatial boundary, which the mask zeroes out.
        """
        acc = v * taps[4]                               # centre tap: no shift
        for dy, dx in offs:
            k = (dy + 1) * 3 + (dx + 1)
            off = dy * W + dx                           # lane offset of (y+dy, x+dx)
            shifted = pltpu.roll(v, (-roll_sign * off) % N, axis=1)
            acc = acc + jnp.where(masks[(dy, dx)], shifted, 0.0) * taps[k]
        return acc

    wdx = wdx_ref[...]
    wdi = wdi_ref[...]

    # ---- self.W : depthwise 3x3 on x + bias ----
    xc = dw3x3(x_ref[...], wdx) + bdx_ref[...]          # (Cin, N) f32

    # ---- self.Wy : 1x1 conv on concat(xc, h) ----
    # Chid-wide block on the MXU (bf16 in, f32 acc); the K=Cin(=4) x-block is
    # folded out of the MXU into 4 broadcast multiply-adds on the VPU.
    i_b = jnp.dot(wyh_ref[...], h_ref[...].astype(jnp.bfloat16),
                  preferred_element_type=jnp.float32) + by_ref[...]
    wyx = wyx_ref[...]
    for ci in range(Cin):
        i_b = i_b + wyx[:, ci:ci + 1] * xc[ci:ci + 1, :]

    # ---- self.Wi : depthwise 3x3 + ReLU6 ----
    bfeat = jnp.clip(dw3x3(i_b, wdi), 0.0, 6.0)         # (Chid, N) f32

    # ---- fused gate 1x1 convs: one (4*Chid, Chid) @ (Chid, N) bf16 matmul ----
    g = jnp.dot(wg_ref[...], bfeat.astype(jnp.bfloat16),
                preferred_element_type=jnp.float32)      # (4*Chid, N) f32
    sig = jax.nn.sigmoid(g[:3 * Chid])                   # one EUP pass, stacked gates
    i_t = sig[:Chid]
    f_t = sig[Chid:2 * Chid]
    o_t = sig[2 * Chid:3 * Chid]
    gc = jnp.clip(g[3 * Chid:], 0.0, 6.0)

    # ---- LSTM state update (f32) ----
    c_t = f_t * c_ref[...] + i_t * gc
    h_t = o_t * jnp.clip(c_t, 0.0, 6.0)
    h_out_ref[...] = h_t
    c_out_ref[...] = c_t


# ----------------------------------------------------------------------------
# Wrapper
# ----------------------------------------------------------------------------
def bottleneck_lstm_step(x, h, c, params, *, roll_sign=1):
    """One BottleneckLSTMCell step.

    x: (B, Cin, H, W); h, c: (B, Chid, H, W) -- NCHW, exactly as in PyTorch.
    Returns (h_t, c_t) in the same layout.
    """
    B, Cin, H, W = x.shape
    Chid = h.shape[1]
    HW = H * W
    N = B * HW

    # --- weight re-layout (cheap, fused by XLA under jit) ---
    wdx = params["W_w"].reshape(Cin, 9).T[:, :, None]            # (9, Cin, 1)
    bdx = params["W_b"].reshape(Cin, 1)
    wy = params["Wy_w"].reshape(Chid, Cin + Chid)                # (out, in)
    wyx = wy[:, :Cin]                                            # x channels (VPU, f32)
    wyh = wy[:, Cin:].astype(jnp.bfloat16)                       # h channels (MXU, bf16)
    by = params["Wy_b"].reshape(Chid, 1)
    wdi = params["Wi_w"].reshape(Chid, 9).T[:, :, None]          # (9, Chid, 1)
    wg = jnp.concatenate([params["Wi_t_w"].reshape(Chid, Chid),
                          params["Wf_t_w"].reshape(Chid, Chid),
                          params["Wo_t_w"].reshape(Chid, Chid),
                          params["Wconv_w"].reshape(Chid, Chid)],
                         axis=0).astype(jnp.bfloat16)            # (4*Chid, Chid)

    # --- fold batch + spatial plane onto the lane axis: (B,C,H,W) -> (C, B*H*W) ---
    def to_lanes(a):
        return a.transpose(1, 0, 2, 3).reshape(a.shape[1], N)

    x2, h2, c2 = to_lanes(x), to_lanes(h), to_lanes(c)

    operands = (x2, h2, c2, wdx, bdx, wyx, wyh, by, wdi, wg)

    def full_block(shape):
        return pl.BlockSpec(shape, lambda i, n=len(shape): (0,) * n)

    in_specs = [full_block(op.shape) for op in operands]
    out_specs = [full_block((Chid, N)), full_block((Chid, N))]

    h_out, c_out = pl.pallas_call(
        functools.partial(bottleneck_lstm_cell_kernel,
                          H=H, W=W, HW=HW, roll_sign=roll_sign),
        out_shape=(jax.ShapeDtypeStruct((Chid, N), jnp.float32),
                   jax.ShapeDtypeStruct((Chid, N), jnp.float32)),
        grid_spec=pltpu.PrefetchScalarGridSpec(
            num_scalar_prefetch=0,
            grid=(1,),
            in_specs=in_specs,
            out_specs=out_specs,
        ),
        input_output_aliases={1: 0, 2: 1},   # h -> h_t, c -> c_t (in-place state)
        compiler_params=pltpu.CompilerParams(
            dimension_semantics=("arbitrary",),
            vmem_limit_bytes=32 * 1024 * 1024),
    )(*operands)

    def from_lanes(a):
        return a.reshape(Chid, B, H, W).transpose(1, 0, 2, 3)

    return from_lanes(h_out), from_lanes(c_out)


# ----------------------------------------------------------------------------
# Pure-JAX reference (NCHW, lax convs) for the correctness check
# ----------------------------------------------------------------------------
def reference_step(x, h, c, params):
    dn = ("NCHW", "OIHW", "NCHW")
    Cin = x.shape[1]
    Chid = h.shape[1]

    def conv(v, w, groups=1):
        return lax.conv_general_dilated(v, w, (1, 1), "SAME",
                                        dimension_numbers=dn,
                                        feature_group_count=groups)

    xc = conv(x, params["W_w"], groups=Cin) + params["W_b"].reshape(1, Cin, 1, 1)
    y = jnp.concatenate([xc, h], axis=1)
    i = conv(y, params["Wy_w"]) + params["Wy_b"].reshape(1, Chid, 1, 1)
    b = jnp.clip(conv(i, params["Wi_w"], groups=Chid), 0.0, 6.0)
    i_t = jax.nn.sigmoid(conv(b, params["Wi_t_w"]))
    f_t = jax.nn.sigmoid(conv(b, params["Wf_t_w"]))
    o_t = jax.nn.sigmoid(conv(b, params["Wo_t_w"]))
    g = jnp.clip(conv(b, params["Wconv_w"]), 0.0, 6.0)
    c_t = f_t * c + i_t * g
    h_t = o_t * jnp.clip(c_t, 0.0, 6.0)
    return h_t, c_t


def make_params(key, Cin, Chid):
    """Deterministic xavier-uniform conv weights, zero biases (PyTorch shapes)."""
    def xavier(k, shape):
        fan_out = shape[0] * shape[2] * shape[3]
        fan_in = shape[1] * shape[2] * shape[3]
        bound = math.sqrt(6.0 / (fan_in + fan_out))
        return jax.random.uniform(k, shape, jnp.float32, -bound, bound)

    ks = jax.random.split(key, 7)
    return {
        "W_w": xavier(ks[0], (Cin, 1, 3, 3)),            # depthwise, groups=Cin
        "W_b": jnp.zeros((Cin,), jnp.float32),
        "Wy_w": xavier(ks[1], (Chid, Cin + Chid, 1, 1)),
        "Wy_b": jnp.zeros((Chid,), jnp.float32),
        "Wi_w": xavier(ks[2], (Chid, 1, 3, 3)),          # depthwise, groups=Chid
        "Wi_t_w": xavier(ks[3], (Chid, Chid, 1, 1)),
        "Wf_t_w": xavier(ks[4], (Chid, Chid, 1, 1)),
        "Wo_t_w": xavier(ks[5], (Chid, Chid, 1, 1)),
        "Wconv_w": xavier(ks[6], (Chid, Chid, 1, 1)),
        # self.Wc_t exists in the PyTorch module but is unused in forward.
    }


if __name__ == "__main__":
    B, Cin, Chid, H, W = 2, 4, 32, 16, 16   # hidden_channels must be even

    key = jax.random.PRNGKey(0)
    kx, kp = jax.random.split(key)
    x = jax.random.normal(kx, (B, Cin, H, W), jnp.float32)      # NCHW, as in PyTorch
    # BottleneckLSTM.init_hidden -> zero hidden / cell state
    h0 = jnp.zeros((B, Chid, H, W), jnp.float32)
    c0 = jnp.zeros((B, Chid, H, W), jnp.float32)
    params = make_params(kp, Cin, Chid)

    roll_sign = detect_roll_sign()
    step = jax.jit(functools.partial(bottleneck_lstm_step, roll_sign=roll_sign))
    h_t, c_t = step(x, h0, c0, params)
    jax.block_until_ready((h_t, c_t))

    h_ref, c_ref = reference_step(x, h0, c0, params)
    # bf16 MXU inputs with f32 accumulation -> slightly looser tolerance.
    np.testing.assert_allclose(np.asarray(h_t), np.asarray(h_ref), rtol=5e-3, atol=5e-3)
    np.testing.assert_allclose(np.asarray(c_t), np.asarray(c_ref), rtol=5e-3, atol=5e-3)

    print("KERNEL_OK")
</pallas_src>

<mosaic_0001>
module attributes {stable_mosaic.version = 11 : i64} {
  func.func @_roll_probe_kernel(%arg0: memref<8x128xf32, #tpu.memory_space<vmem>>, %arg1: memref<8x128xf32, #tpu.memory_space<vmem>>) attributes {dimension_semantics = [], scalar_prefetch = 0 : i64, scratch_operands = 0 : i64, tpu.core_type = #tpu.core_type<tc>} {
    %c0 = arith.constant 0 : index
    %c0_0 = arith.constant 0 : index
    %0 = vector.load %arg0[%c0, %c0_0] : memref<8x128xf32, #tpu.memory_space<vmem>>, vector<8x128xf32>
    %c1_i32 = arith.constant 1 : i32
    %1 = tpu.dynamic_rotate %0 by %c1_i32 dim 1 : vector<8x128xf32>, i32 -> vector<8x128xf32>
    %c0_1 = arith.constant 0 : index
    %c0_2 = arith.constant 0 : index
    %2 = vector.load %arg1[%c0_1, %c0_2] : memref<8x128xf32, #tpu.memory_space<vmem>>, vector<8x128xf32>
    tpu.vector_store %arg1[%c0_1, %c0_2], %1 {strides = array<i32>} : memref<8x128xf32, #tpu.memory_space<vmem>>, vector<8x128xf32>,
    return
  }
}

</mosaic_0001>

<llo_original>
// kernel: tpu_custom_call.1
$region0: #{tpu_custom_call.1}
  #allocation0 [shape = 'u32[]', space=smem, size = 0x4, offset = 0x4, fixed_abs, tag = 'smem constant byte address 0x4 - core index']
  #allocation1 [shape = 'u32[72,128]{1,0:T(1,128)}', space=vmem, size = 0x9000, scoped, tag = 'internal scratch']
  %s0 = inlined_call_operand.hbm [shape: f32[8,128], index: 0, kind: input, shape index: {}]
  %s1 = inlined_call_operand.hbm [shape: f32[8,128], index: 1, kind: output, shape index: {}]
  %s2 = sld [smem:[#allocation0]]
  $region18: #{tpu_custom_call.1} parent=0
    _
  %s4 = ssub.s32 1, %s2
  %s5 = scalar_select 0, %s4, %s2
  $region1: #{tpu_custom_call.1} parent=0
    #allocation2 [shape = 'u8[4096]{0}', space=vmem, size = 0x1000, scoped, tag = 'input window, operand 0, single buffered']
    #allocation3 [shape = 's32[1]{0}', space=sflag, size = 0x4, scoped, tag = 'scoped memory for tpu_custom_call.1']
    #allocation4 [shape = 's32[1]{0}', space=sflag, size = 0x4, scoped, tag = 'scoped memory for tpu_custom_call.1']
    #allocation5 [shape = 'u8[4096]{0}', space=vmem, size = 0x1000, scoped, tag = 'output window, operand 0, single buffered']
    %6 = vsyncpa [#allocation3], 0
    %7 = vsyncpa [#allocation4], 0
    // Predicated region
    $region2: #{tpu_custom_call.1} parent=1 // pred_check
      _
    $region3: #{tpu_custom_call.1} parent=1 // pred_check_branch
      %9 = sbr.rel (0) target = $region5
    $region4: #{tpu_custom_call.1} parent=1 // pred_region
      %11 = vsyncadd [#allocation3], 0
      %s13 = sshll.u32 %s0, 4
      %s14 = int_to_ptr.hbm [resolvable:$true] %s13
      %s15 = sshll.u32 [#allocation2], 4
      %s16 = int_to_ptr.vmem [resolvable:$true] %s15
      %18 = dma.hbm_to_vmem [thread:$0]  %s14, 128, %s16, [#allocation3]
    $region5: #{tpu_custom_call.1} parent=1 // pred_fallthru
      _
    // Predicated region
    $region6: #{tpu_custom_call.1} parent=1 // pred_check
      _
    $region7: #{tpu_custom_call.1} parent=1 // pred_check_branch
      %20 = sbr.rel (0) target = $region9
    $region8: #{tpu_custom_call.1} parent=1 // pred_region
      %22 = dma.done [#allocation3], 128
    $region9: #{tpu_custom_call.1} parent=1 // pred_fallthru
      _
    %v23 = vld [vmem:[#allocation2] sm:$0xff]
    %24 = vrot.lane.b32.xlu0 %v23, 1
    %v25 = vpop.permute.xlu0 %24
    %26 = vst [vmem:[#allocation5] sm:$0xff] %v25
    // Predicated region
    $region10: #{tpu_custom_call.1} parent=1 // pred_check
      _
    $region11: #{tpu_custom_call.1} parent=1 // pred_check_branch
      %28 = sbr.rel (0) target = $region13
    $region12: #{tpu_custom_call.1} parent=1 // pred_region
      %30 = vsyncadd [#allocation4], 0
      %s32 = sshll.u32 [#allocation5], 4
      %s33 = int_to_ptr.vmem [resolvable:$true] %s32
      %s34 = sshll.u32 %s1, 4
      %s35 = int_to_ptr.hbm [resolvable:$true] %s34
      %37 = dma.vmem_to_hbm [thread:$0]  %s33, 128, %s35, [#allocation4]
    $region13: #{tpu_custom_call.1} parent=1 // pred_fallthru
      _
    // Predicated region
    $region14: #{tpu_custom_call.1} parent=1 // pred_check
      _
    $region15: #{tpu_custom_call.1} parent=1 // pred_check_branch
      %39 = sbr.rel (0) target = $region17
    $region16: #{tpu_custom_call.1} parent=1 // pred_region
      %41 = dma.done [#allocation4], 128
    $region17: #{tpu_custom_call.1} parent=1 // pred_fallthru
      _
    %42 = vsyncpa [#allocation3], 1
    %43 = vsyncpa [#allocation4], 1

</llo_original>
